<compile_context>
chip_gen: v7x
topology: tpu7x:2x2x1
jax: 0.10.0
libtpu: 0.0.40
codegen_flags: <defaults>
</compile_context>

<pallas_src>
import math

import jax
import jax.numpy as jnp
from jax.experimental import pallas as pl
from jax.experimental.pallas import tpu as pltpu


def _round_up(x: int, m: int) -> int:
    return ((x + m - 1) // m) * m


def _pe_kernel(inv_freq_ref, phase_ref, sin_lo_ref, cos_lo_ref, o_ref):
    """Write one (tile_m, hidden) row-tile of the sinusoidal PE table.

    pe[p, 2i]   = sin(p * inv_freq_i)
    pe[p, 2i+1] = cos(p * inv_freq_i) = sin(p * inv_freq_i + pi/2)

    With p = row0 + r (row0 = tile offset, r = row inside the tile):
      angle = (row0*inv_freq + phase) + r*inv_freq = hi + lo
      sin(hi + lo) = sin(hi)*cos(lo) + cos(hi)*sin(lo)
    so only the (1, hidden) "hi" row needs transcendentals per tile; the
    (tile_m, hidden) body is 2 mul + 1 add per element on the VPU.
    """
    tile_m = o_ref.shape[0]
    row0 = (pl.program_id(0) * tile_m).astype(jnp.float32)

    hi = row0 * inv_freq_ref[...] + phase_ref[...]      # (1, hidden)
    hi_s = jnp.sin(hi)                                  # (1, hidden) EUP
    hi_c = jnp.cos(hi)                                  # (1, hidden) EUP

    # Broadcast the (1, hidden) rows over the tile's sublanes; pure VPU work.
    o_ref[...] = (hi_s * cos_lo_ref[...] + hi_c * sin_lo_ref[...]).astype(o_ref.dtype)


def _choose_tile_m(max_len: int, hidden: int, dtype) -> int:
    """Byte-capped row-tile size (sublane-aligned, >=2 tiles when possible)."""
    itemsize = jnp.dtype(dtype).itemsize
    # Sublane packing: 8 rows for 32-bit, 16 for 16-bit, 32 for 8-bit dtypes.
    sublane = {4: 8, 2: 16, 1: 32}.get(itemsize, 8)

    # VMEM per tile row: double-buffered output + double-buffered f32
    # sin_lo/cos_lo resident tables.  Keep the total around ~8 MiB so the
    # kernel fits every generation's default scoped VMEM (v5e 16 MiB,
    # v6e 32 MiB, v7x 32 MiB scoped / 64 MiB physical) without special flags.
    bytes_per_row = 2 * hidden * itemsize + 4 * hidden * 4
    budget = 8 * 1024 * 1024
    tile_m = max(sublane, (budget // bytes_per_row) // sublane * sublane)
    tile_m = min(tile_m, 2048)                        # row cap for tiny hidden
    tile_m = min(tile_m, _round_up(max_len, sublane))  # never bigger than table

    # v7x: two TensorCores only split work along the parallel grid axis, so
    # avoid collapsing to a single row tile when the table can be split.
    if pl.cdiv(max_len, tile_m) < 2 and max_len > sublane:
        tile_m = max(sublane, _round_up(pl.cdiv(max_len, 2), sublane))
    return tile_m


def build_pe_table(hidden_size: int, max_len: int, dtype=jnp.float32):
    """Build the (max_len, hidden_size) PE table with a row-tiled Pallas kernel."""
    tile_m = _choose_tile_m(max_len, hidden_size, dtype)
    grid = (pl.cdiv(max_len, tile_m),)

    # --- Lane-constant rows, hoisted out of the kernel (computed once). ---
    lane = jnp.arange(hidden_size, dtype=jnp.int32)
    pair = (lane // 2).astype(jnp.float32)                       # 0,0,1,1,2,2,...
    inv_freq = jnp.exp(pair * jnp.float32(-2.0 * math.log(10000.0) / hidden_size))
    phase = jnp.where(lane % 2 == 0, 0.0, 0.5 * math.pi).astype(jnp.float32)
    inv_freq = inv_freq[None, :]                                 # (1, H)
    phase = phase[None, :]                                       # (1, H)

    # --- Row-local angle tables: sin/cos(r * inv_freq), r in [0, tile_m). ---
    # Computed once in plain JAX; resident in VMEM across all grid steps.
    r = jnp.arange(tile_m, dtype=jnp.float32)[:, None]           # (tile_m, 1)
    lo = r * inv_freq                                            # (tile_m, H)
    sin_lo = jnp.sin(lo)
    cos_lo = jnp.cos(lo)

    const_spec = pl.BlockSpec((1, hidden_size), lambda i: (0, 0))
    lo_spec = pl.BlockSpec((tile_m, hidden_size), lambda i: (0, 0))

    table = pl.pallas_call(
        _pe_kernel,
        out_shape=jax.ShapeDtypeStruct((max_len, hidden_size), dtype),
        grid=grid,
        in_specs=[const_spec, const_spec, lo_spec, lo_spec],
        out_specs=pl.BlockSpec((tile_m, hidden_size), lambda i: (i, 0)),
        compiler_params=pltpu.CompilerParams(
            dimension_semantics=("parallel",),  # v7x: shard row tiles over 2 TCs
        ),
    )(inv_freq, phase, sin_lo, cos_lo)
    return table


class PositionalEmbedding:
    """Mirrors the PyTorch module: table built once at init, forward slices it."""

    def __init__(self, hidden_size: int, max_len: int = 5000, dtype=jnp.float32):
        # Equivalent of register_buffer('pe', ...): computed once, cached.
        self.pe = build_pe_table(hidden_size, max_len, dtype)[None]  # (1, L, H)

    def __call__(self, x):
        # forward(x) -> pe[:, :x.size(1)]
        # TODO(synk): in a full model, fuse this slice + the `x + pe` add into
        # the consumer kernel instead of materializing a separate array.
        return self.pe[:, : x.shape[1]]


def _reference_pe(hidden_size: int, max_len: int):
    """Pure-JAX reference mirroring the PyTorch __init__ (for sanity check)."""
    position = jnp.arange(0, max_len, dtype=jnp.float32)[:, None]
    div_term = jnp.exp(
        jnp.arange(0, hidden_size, 2, dtype=jnp.float32)
        * -(math.log(10000.0) / hidden_size)
    )
    pe = jnp.zeros((max_len, hidden_size), dtype=jnp.float32)
    pe = pe.at[:, 0::2].set(jnp.sin(position * div_term))
    pe = pe.at[:, 1::2].set(jnp.cos(position * div_term))
    return pe[None]


if __name__ == "__main__":
    hidden_size = 192
    max_len = 20
    seq_len = 10

    # Deterministic example input; only seq_len (axis 1) is used by forward(),
    # matching torch.ones(size=(1, 10, 1)) in the original snippet.
    key = jax.random.PRNGKey(0)
    x = jax.random.normal(key, (1, seq_len, 1), dtype=jnp.float32)

    module = PositionalEmbedding(hidden_size=hidden_size, max_len=max_len)
    out = module(x)
    out = jax.block_until_ready(out)

    ref_full = _reference_pe(hidden_size, max_len)        # (1, L, H)
    assert module.pe.shape == (1, max_len, hidden_size), module.pe.shape
    assert jnp.allclose(module.pe, ref_full, atol=1e-4, rtol=1e-4), (
        "full table mismatch vs reference"
    )
    assert out.shape == (1, seq_len, hidden_size), out.shape
    assert jnp.allclose(out, ref_full[:, :seq_len], atol=1e-4, rtol=1e-4), (
        "forward slice mismatch vs reference"
    )

    print("KERNEL_OK")
</pallas_src>

<mosaic_0001>
module attributes {stable_mosaic.version = 11 : i64} {
  func.func @_pe_kernel(%arg0: i32, %arg1: memref<1x192xf32, #tpu.memory_space<vmem>>, %arg2: memref<1x192xf32, #tpu.memory_space<vmem>>, %arg3: memref<16x192xf32, #tpu.memory_space<vmem>>, %arg4: memref<16x192xf32, #tpu.memory_space<vmem>>, %arg5: memref<16x192xf32, #tpu.memory_space<vmem>>) attributes {dimension_semantics = [#tpu.dimension_semantics<parallel>], iteration_bounds = array<i64: 2>, scalar_prefetch = 0 : i64, scratch_operands = 0 : i64, tpu.core_type = #tpu.core_type<tc>, window_params = [{pipeline_mode = #tpu.pipeline_mode<synchronous>, transform_indices = @transform_0, window_bounds = array<i64: 1, 192>}, {pipeline_mode = #tpu.pipeline_mode<synchronous>, transform_indices = @transform_1, window_bounds = array<i64: 1, 192>}, {pipeline_mode = #tpu.pipeline_mode<synchronous>, transform_indices = @transform_2, window_bounds = array<i64: 16, 192>}, {pipeline_mode = #tpu.pipeline_mode<synchronous>, transform_indices = @transform_3, window_bounds = array<i64: 16, 192>}, {transform_indices = @transform_4, window_bounds = array<i64: 16, 192>}]} {
    %c16_i32 = arith.constant 16 : i32
    %0 = arith.muli %arg0, %c16_i32 : i32
    %1 = arith.sitofp %0 : i32 to f32
    %c0 = arith.constant 0 : index
    %c0_0 = arith.constant 0 : index
    %2 = vector.load %arg1[%c0, %c0_0] : memref<1x192xf32, #tpu.memory_space<vmem>>, vector<1x192xf32>
    %3 = vector.broadcast %1 : f32 to vector<1x192xf32>
    %4 = arith.mulf %3, %2 : vector<1x192xf32>
    %c0_1 = arith.constant 0 : index
    %c0_2 = arith.constant 0 : index
    %5 = vector.load %arg2[%c0_1, %c0_2] : memref<1x192xf32, #tpu.memory_space<vmem>>, vector<1x192xf32>
    %6 = arith.addf %4, %5 : vector<1x192xf32>
    %7 = math.sin %6 : vector<1x192xf32>
    %8 = math.cos %6 : vector<1x192xf32>
    %c0_3 = arith.constant 0 : index
    %c0_4 = arith.constant 0 : index
    %9 = vector.load %arg4[%c0_3, %c0_4] : memref<16x192xf32, #tpu.memory_space<vmem>>, vector<16x192xf32>
    %10 = vector.broadcast %7 : vector<1x192xf32> to vector<16x192xf32>
    %11 = arith.mulf %10, %9 : vector<16x192xf32>
    %c0_5 = arith.constant 0 : index
    %c0_6 = arith.constant 0 : index
    %12 = vector.load %arg3[%c0_5, %c0_6] : memref<16x192xf32, #tpu.memory_space<vmem>>, vector<16x192xf32>
    %13 = vector.broadcast %8 : vector<1x192xf32> to vector<16x192xf32>
    %14 = arith.mulf %13, %12 : vector<16x192xf32>
    %15 = arith.addf %11, %14 : vector<16x192xf32>
    %c0_7 = arith.constant 0 : index
    %c0_8 = arith.constant 0 : index
    %16 = vector.load %arg5[%c0_7, %c0_8] : memref<16x192xf32, #tpu.memory_space<vmem>>, vector<16x192xf32>
    tpu.vector_store %arg5[%c0_7, %c0_8], %15 {strides = array<i32>} : memref<16x192xf32, #tpu.memory_space<vmem>>, vector<16x192xf32>,
    return
  }
  func.func @transform_0(%arg0: i32) -> (i32, i32) {
    %c0_i32 = arith.constant 0 : i32
    %c0_i32_0 = arith.constant 0 : i32
    %c0_i32_1 = arith.constant 0 : i32
    return %c0_i32, %c0_i32_0 : i32, i32
  }
  func.func @transform_1(%arg0: i32) -> (i32, i32) {
    %c0_i32 = arith.constant 0 : i32
    %c0_i32_0 = arith.constant 0 : i32
    %c0_i32_1 = arith.constant 0 : i32
    return %c0_i32, %c0_i32_0 : i32, i32
  }
  func.func @transform_2(%arg0: i32) -> (i32, i32) {
    %c0_i32 = arith.constant 0 : i32
    %c0_i32_0 = arith.constant 0 : i32
    %c0_i32_1 = arith.constant 0 : i32
    return %c0_i32, %c0_i32_0 : i32, i32
  }
  func.func @transform_3(%arg0: i32) -> (i32, i32) {
    %c0_i32 = arith.constant 0 : i32
    %c0_i32_0 = arith.constant 0 : i32
    %c0_i32_1 = arith.constant 0 : i32
    return %c0_i32, %c0_i32_0 : i32, i32
  }
  func.func @transform_4(%arg0: i32) -> (i32, i32) {
    %c0_i32 = arith.constant 0 : i32
    %c0_i32_0 = arith.constant 0 : i32
    return %arg0, %c0_i32 : i32, i32
  }
}

</mosaic_0001>

<llo_original>
// kernel: tpu_custom_call.1
$region0: #{tpu_custom_call.1}
  #allocation0 [shape = 'u32[]', space=smem, size = 0x4, offset = 0x4, fixed_abs, tag = 'smem constant byte address 0x4 - core index']
  #allocation1 [shape = 'u32[144,128]{1,0:T(1,128)}', space=vmem, size = 0x12000, scoped, tag = 'internal scratch']
  %s0 = inlined_call_operand.hbm [shape: f32[1,192], index: 0, kind: input, shape index: {}]
  %s1 = inlined_call_operand.vmem [shape: f32[1,192], index: 1, kind: input, shape index: {}]
  %s2 = inlined_call_operand.hbm [shape: f32[16,192], index: 2, kind: input, shape index: {}]
  %s3 = inlined_call_operand.hbm [shape: f32[16,192], index: 3, kind: input, shape index: {}]
  %s4 = inlined_call_operand.hbm [shape: f32[20,192], index: 4, kind: output, shape index: {}]
  %s5 = sld [smem:[#allocation0]]
  $region61: #{tpu_custom_call.1} parent=0
    _
  %s7 = ssub.s32 1, %s5
  %s8 = scalar_select 0, %s7, %s5
  $region1: #{tpu_custom_call.1} parent=0
    #allocation2 [shape = 'u8[1024]{0}', space=vmem, size = 0x400, scoped, tag = 'input window, operand 0, single buffered']
    #allocation3 [shape = 's32[2]{0}', space=sflag, size = 0x8, scoped, tag = 'scoped memory for tpu_custom_call.1']
    #allocation4 [shape = 's32[2]{0}', space=sflag, size = 0x8, scoped, tag = 'scoped memory for tpu_custom_call.1']
    #allocation5 [shape = 'u8[16384]{0}', space=vmem, size = 0x4000, scoped, tag = 'input window, operand 2, single buffered']
    #allocation6 [shape = 's32[1]{0}', space=sflag, size = 0x4, scoped, tag = 'scoped memory for tpu_custom_call.1']
    #allocation7 [shape = 'u8[16384]{0}', space=vmem, size = 0x4000, scoped, tag = 'input window, operand 3, single buffered']
    #allocation8 [shape = 'u8[32768]{0}', space=vmem, size = 0x8000, scoped, tag = 'output window, operand 0']
    %9 = vsyncpa [#allocation3], 0
    %10 = vsyncpa [#allocation6], 0
    %11 = vsyncpa [#allocation4], 0
    %s12 = scalar_lea.sflag [#allocation4], 1
    %13 = vsyncpa %s12, 0
    loop: start=0, step=1, limit=4
    $region2: #{tpu_custom_call.1} parent=1 // loop_pre_header
      _
    $region3: #{tpu_custom_call.1} parent=1 // loop_header
      %s15 = sphi 0, %s19
      %p16 = scmp.ge.s32.totalorder %s15, 4
      %s23 = sphi 0, %s23
      %s25 = sphi 0, %s23
      %s26 = sphi 0, %s25
      %s40 = sphi 0, %s26
      %s44 = sphi 0, %s44
      %s46 = sphi 0, %s44
      %s47 = sphi 0, %s46
      %s61 = sphi 0, %s47
      %s65 = sphi 0, %s65
      %s67 = sphi 0, %s65
      %s68 = sphi 0, %s67
      %s82 = sphi 0, %s68
      %s86 = sphi 0, %s86
      %s88 = sphi 0, %s86
      %s89 = sphi 0, %s88
      %s103 = sphi 0, %s89
      %s109 = sphi 0, %s111
      %s112 = sphi 0, %s109
      %s113 = sphi 0, %s112
      %s129 = sphi 0, %s113
    $region4: #{tpu_custom_call.1} parent=1 // loop_header_branch
      %18 = sbr.rel (%p16) target = $region8
    $region5: #{tpu_custom_call.1} parent=1 // loop_body
      %s20 = ssub.s32 %s15, 1
      %s21 = ssub.s32 %s15, 2
      %s22 = sadd.s32 %s15, 1
      %s24 = sadd.s32 %s23, 1
      %p27 = scmp.eq.s32.totalorder %s15, 1
      %p28 = scmp.ne.s32.totalorder %s23, %s25
      %p29 = scmp.eq.s32.totalorder %s15, 0
      %p30 = por %p28, %p29
      %p31 = scmp.ne.s32.totalorder %s23, %s25
      %p32 = scmp.eq.s32.totalorder %s20, 1
      %p33 = por %p31, %p32
      %p34 = scmp.ne.s32.totalorder %s25, %s26
      %p35 = scmp.eq.s32.totalorder %s20, 0
      %p36 = por %p34, %p35
      %p37 = scmp.ne.s32.totalorder %s25, %s26
      %p38 = scmp.eq.s32.totalorder %s21, 1
      %p39 = por %p37, %p38
      %p41 = scmp.ne.s32.totalorder %s26, %s40
      %p42 = scmp.eq.s32.totalorder %s21, 0
      %p43 = por %p41, %p42
      %s45 = sadd.s32 %s44, 1
      %p48 = scmp.eq.s32.totalorder %s15, 1
      %p49 = scmp.ne.s32.totalorder %s44, %s46
      %p50 = scmp.eq.s32.totalorder %s15, 0
      %p51 = por %p49, %p50
      %p52 = scmp.ne.s32.totalorder %s44, %s46
      %p53 = scmp.eq.s32.totalorder %s20, 1
      %p54 = por %p52, %p53
      %p55 = scmp.ne.s32.totalorder %s46, %s47
      %p56 = scmp.eq.s32.totalorder %s20, 0
      %p57 = por %p55, %p56
      %p58 = scmp.ne.s32.totalorder %s46, %s47
      %p59 = scmp.eq.s32.totalorder %s21, 1
      %p60 = por %p58, %p59
      %p62 = scmp.ne.s32.totalorder %s47, %s61
      %p63 = scmp.eq.s32.totalorder %s21, 0
      %p64 = por %p62, %p63
      %s66 = sadd.s32 %s65, 1
      %p69 = scmp.eq.s32.totalorder %s15, 1
      %p70 = scmp.ne.s32.totalorder %s65, %s67
      %p71 = scmp.eq.s32.totalorder %s15, 0
      %p72 = por %p70, %p71
      %p73 = scmp.ne.s32.totalorder %s65, %s67
      %p74 = scmp.eq.s32.totalorder %s20, 1
      %p75 = por %p73, %p74
      %p76 = scmp.ne.s32.totalorder %s67, %s68
      %p77 = scmp.eq.s32.totalorder %s20, 0
      %p78 = por %p76, %p77
      %p79 = scmp.ne.s32.totalorder %s67, %s68
      %p80 = scmp.eq.s32.totalorder %s21, 1
      %p81 = por %p79, %p80
      %p83 = scmp.ne.s32.totalorder %s68, %s82
      %p84 = scmp.eq.s32.totalorder %s21, 0
      %p85 = por %p83, %p84
      %s87 = sadd.s32 %s86, 1
      %p90 = scmp.eq.s32.totalorder %s15, 1
      %p91 = scmp.ne.s32.totalorder %s86, %s88
      %p92 = scmp.eq.s32.totalorder %s15, 0
      %p93 = por %p91, %p92
      %p94 = scmp.ne.s32.totalorder %s86, %s88
      %p95 = scmp.eq.s32.totalorder %s20, 1
      %p96 = por %p94, %p95
      %p97 = scmp.ne.s32.totalorder %s88, %s89
      %p98 = scmp.eq.s32.totalorder %s20, 0
      %p99 = por %p97, %p98
      %p100 = scmp.ne.s32.totalorder %s88, %s89
      %p101 = scmp.eq.s32.totalorder %s21, 1
      %p102 = por %p100, %p101
      %p104 = scmp.ne.s32.totalorder %s89, %s103
      %p105 = scmp.eq.s32.totalorder %s21, 0
      %p106 = por %p104, %p105
      %s107 = ssub.s32 %s15, %s22
      %p108 = scmp.eq.s32.totalorder %s107, 0
      %s110 = sadd.s32 %s109, 1
      %s111 = scalar_select %p108, %s109, %s110
      %p114 = pneg %p108
      %p115 = scmp.eq.s32.totalorder %s15, 1
      %p116 = por %p114, %p115
      %p117 = scmp.ne.s32.totalorder %s109, %s112
      %p118 = scmp.eq.s32.totalorder %s15, 0
      %p119 = por %p117, %p118
      %p120 = scmp.ne.s32.totalorder %s109, %s112
      %p121 = scmp.eq.s32.totalorder %s20, 1
      %p122 = por %p120, %p121
      %p123 = scmp.ne.s32.totalorder %s112, %s113
      %p124 = scmp.eq.s32.totalorder %s20, 0
      %p125 = por %p123, %p124
      %p126 = scmp.ne.s32.totalorder %s112, %s113
      %p127 = scmp.eq.s32.totalorder %s21, 1
      %p128 = por %p126, %p127
      %p130 = scmp.ne.s32.totalorder %s113, %s129
      %p131 = scmp.eq.s32.totalorder %s21, 0
      %p132 = por %p130, %p131
      %p133 = scmp.le.s32.totalorder 1, %s15
      %p134 = scmp.lt.s32.totalorder %s15, 3
      %p135 = pnand %p133, %p134
      %p136 = pneg %p135
      // Predicated region
      $region9: #{tpu_custom_call.1} parent=5 // pred_check
        _
      $region10: #{tpu_custom_call.1} parent=5 // pred_check_branch
        %138 = sbr.rel (%p135) target = $region12
      $region11: #{tpu_custom_call.1} parent=5 // pred_region
        %s139 = ssub.s32 %s15, 1
        // Predicated region
        $region13: #{tpu_custom_call.1} parent=11 // pred_check
          %p140 = pneg %p36
        $region14: #{tpu_custom_call.1} parent=11 // pred_check_branch
          %142 = sbr.rel (%p140) target = $region16
        $region15: #{tpu_custom_call.1} parent=11 // pred_region
          %s144 = ssub.s32 32, 32
          %145 = vsyncadd [#allocation3], %s144
          %s147 = sshll.u32 [#allocation2], 4
          %s148 = int_to_ptr.vmem [resolvable:$true] %s147
          %150 = dma.hbm_to_vmem [thread:$0]  %s0, 32, %s148, [#allocation3]
        $region16: #{tpu_custom_call.1} parent=11 // pred_fallthru
          _
        // Predicated region
        $region17: #{tpu_custom_call.1} parent=11 // pred_check
          %p151 = pneg %p57
        $region18: #{tpu_custom_call.1} parent=11 // pred_check_branch
          %153 = sbr.rel (%p151) target = $region20
        $region19: #{tpu_custom_call.1} parent=11 // pred_region
          _
        $region20: #{tpu_custom_call.1} parent=11 // pred_fallthru
          _
        // Predicated region
        $region21: #{tpu_custom_call.1} parent=11 // pred_check
          %p154 = pneg %p78
        $region22: #{tpu_custom_call.1} parent=11 // pred_check_branch
          %156 = sbr.rel (%p154) target = $region24
        $region23: #{tpu_custom_call.1} parent=11 // pred_region
          %s158 = ssub.s32 512, 512
          %159 = vsyncadd [#allocation6], %s158
          %s160 = sshll.u32 [#allocation5], 4
          %s161 = int_to_ptr.vmem [resolvable:$true] %s160
          %166 = dma.hbm_to_vmem [thread:$0]  %s2, 512, %s161, [#allocation6], 256, 256, 16
        $region24: #{tpu_custom_call.1} parent=11 // pred_fallthru
          _
        // Predicated region
        $region25: #{tpu_custom_call.1} parent=11 // pred_check
          %p167 = pneg %p99
        $region26: #{tpu_custom_call.1} parent=11 // pred_check_branch
          %169 = sbr.rel (%p167) target = $region28
        $region27: #{tpu_custom_call.1} parent=11 // pred_region
          %s171 = ssub.s32 512, 512
          %172 = vsyncadd [#allocation6], %s171
          %s173 = sshll.u32 [#allocation7], 4
          %s174 = int_to_ptr.vmem [resolvable:$true] %s173
          %179 = dma.hbm_to_vmem [thread:$0]  %s3, 512, %s174, [#allocation6], 256, 256, 16
        $region28: #{tpu_custom_call.1} parent=11 // pred_fallthru
          _
      $region12: #{tpu_custom_call.1} parent=5 // pred_fallthru
        _
      %p180 = scmp.lt.s32.totalorder %s15, 2
      // Predicated region
      $region29: #{tpu_custom_call.1} parent=5 // pred_check
        %p181 = pneg %p180
      $region30: #{tpu_custom_call.1} parent=5 // pred_check_branch
        %183 = sbr.rel (%p181) target = $region32
      $region31: #{tpu_custom_call.1} parent=5 // pred_region
        _
      $region32: #{tpu_custom_call.1} parent=5 // pred_fallthru
        _
      %p184 = scmp.le.s32.totalorder 1, %s15
      %p185 = scmp.lt.s32.totalorder %s15, 3
      %p186 = pnand %p184, %p185
      %p187 = pneg %p186
      // Predicated region
      $region33: #{tpu_custom_call.1} parent=5 // pred_check
        _
      $region34: #{tpu_custom_call.1} parent=5 // pred_check_branch
        %189 = sbr.rel (%p186) target = $region36
      $region35: #{tpu_custom_call.1} parent=5 // pred_region
        %s190 = ssub.s32 %s15, 1
        // Predicated region
        $region37: #{tpu_custom_call.1} parent=35 // pred_check
          %p191 = pneg %p36
        $region38: #{tpu_custom_call.1} parent=35 // pred_check_branch
          %193 = sbr.rel (%p191) target = $region40
        $region39: #{tpu_custom_call.1} parent=35 // pred_region
          %194 = dma.done [#allocation3], 32
        $region40: #{tpu_custom_call.1} parent=35 // pred_fallthru
          _
        // Predicated region
        $region41: #{tpu_custom_call.1} parent=35 // pred_check
          %p195 = pneg %p78
        $region42: #{tpu_custom_call.1} parent=35 // pred_check_branch
          %197 = sbr.rel (%p195) target = $region44
        $region43: #{tpu_custom_call.1} parent=35 // pred_region
          %198 = dma.done [#allocation6], 512
        $region44: #{tpu_custom_call.1} parent=35 // pred_fallthru
          _
        // Predicated region
        $region45: #{tpu_custom_call.1} parent=35 // pred_check
          %p199 = pneg %p99
        $region46: #{tpu_custom_call.1} parent=35 // pred_check_branch
          %201 = sbr.rel (%p199) target = $region48
        $region47: #{tpu_custom_call.1} parent=35 // pred_region
          %202 = dma.done [#allocation6], 512
        $region48: #{tpu_custom_call.1} parent=35 // pred_fallthru
          _
        %p203 = pneg %p36
        %p204 = pneg %p33
        %p205 = pneg %p57
        %p206 = pneg %p54
        %p207 = pneg %p78
        %p208 = pneg %p75
        %p209 = pneg %p99
        %p210 = pneg %p96
        %p211 = pneg %p125
        %p212 = pneg %p122
        %s213 = sand.u32 %s112, 1
        %s214 = scalar_lea.sflag [#allocation4], %s213
        %s215 = sand.u32 %s112, 1
        %s216 = smul.addr %s215, 32
        %s217 = scalar_lea.vmem [#allocation8], %s216
        %s218 = smul.u32 2, %s20
        %s219 = ssub.s32 3, %s218
        %p220 = scmp.lt.s32.totalorder %s219, 2
        %s221 = scalar_select %p220, %s219, 2
        %s222 = smul.u32 128, %s221
        %s223 = smul.u32 %s222, 2
        %s224 = smul.u32 %s20, 16
        %s225 = scvt.s32.f32 %s224
        %v226 = vld [vmem:[#allocation2] sm:$0x3]
        %v227 = vstv %s225
        %v228 = vmul.f32 %v227, %v226
        %v229 = vld [vmem:[%s1] sm:$0x3]
        %v230 = vadd.f32 %v228, %v229
        %v231 = vand.u32 2147483647, %v230
        %vm232 = vcmp.le.f32.partialorder %v231, 0.7853982
        %vm233 = vcmp.lt.s32.totalorder %v230, 0
        %v234 = vand.u32 %v230, 2139095040
        %v235 = vshrl.u32 %v234, 23
        %v236 = vsub.s32 %v235, 127
        %v237 = vand.u32 2147483647, %v230
        %v238 = vand.u32 %v237, 8388607
        %v239 = vor.u32 %v238, 8388608
        %v240 = vsub.s32 0, %v239
        %v241 = vadd.s32 %v236, 1
        %vm242 = vcmp.gt.s32.totalorder %v241, 0
        %v243 = vsel %vm242, %v241, 0
        %v244 = vshrl.u32 %v243, 5
        %v245 = vand.u32 %v243, 31
        %v246 = vsub.s32 32, %v245
        %v247 = vshrl.u32 683565275, %v246
        %v248 = vshll.u32 683565275, %v245
        %v249 = vshrl.u32 2475754826, %v246
        %v250 = vor.u32 %v248, %v249
        %v251 = vshll.u32 2475754826, %v245
        %v252 = vshrl.u32 2131351028, %v246
        %v253 = vor.u32 %v251, %v252
        %v254 = vshll.u32 2131351028, %v245
        %v255 = vshrl.u32 2102212464, %v246
        %v256 = vor.u32 %v254, %v255
        %v257 = vshll.u32 2102212464, %v245
        %v258 = vshrl.u32 920167782, %v246
        %v259 = vor.u32 %v257, %v258
        %v260 = vshll.u32 920167782, %v245
        %v261 = vshrl.u32 1326507024, %v246
        %v262 = vor.u32 %v260, %v261
        %vm263 = vcmp.lt.s32.totalorder %v244, 1
        %vm264 = vcmp.lt.s32.totalorder %v244, 2
        %vm265 = vcmp.lt.s32.totalorder %v244, 3
        %vm266 = vcmp.lt.s32.totalorder %v244, 4
        %v267 = vsel %vm263, %v247, %v250
        %v268 = vsel %vm266, %v256, 2102212464
        %v269 = vsel %vm265, %v253, %v268
        %v270 = vsel %vm264, %v267, %v269
        %v271 = vsel %vm263, %v250, %v253
        %v272 = vsel %vm266, %v259, 920167782
        %v273 = vsel %vm265, %v256, %v272
        %v274 = vsel %vm264, %v271, %v273
        %v275 = vsel %vm263, %v253, %v256
        %v276 = vsel %vm266, %v262, 1326507024
        %v277 = vsel %vm265, %v259, %v276
        %v278 = vsel %vm264, %v275, %v277
        %v279 = vshll.u32 %v239, 8
        %v280 = vmul.u32.u64.compose %v279, %v278
        %v281 = vextract.low.u32 %v280
        %v282 = vextract.high.u32 %v280
        %v283 = vmul.u32.u64.compose %v279, %v274
        %v284 = vextract.low.u32 %v283
        %v285 = vextract.high.u32 %v283
        %v286 = vmul.u32 %v279, %v270
        %v287 = vadd.s32 %v282, %v284
        %vm288 = vc.u32 %v282, %v284
        %v289 = vadd.s32 %v285, 1
        %v290 = vsel %vm288, %v289, %v285
        %v291 = vadd.s32 %v286, %v290
        %v292 = vadd.s32 %v291, 536870912
        %v293 = vshrl.u32 %v292, 30
        %v294 = vshll.u32 %v293, 30
        %v295 = vsub.s32 %v291, %v294
        %vm296 = vcmp.lt.s32.totalorder %v295, 0
        %v297 = vsub.s32 0, %v295
        %v298 = vsel %vm296, %v297, %v295
        %v299 = vclz %v298
        %v300 = vsub.s32 %v299, 2
        %vm301 = vcmp.gt.s32.totalorder 0, %v300
        %v302 = vsel %vm301, 0, %v300
        %v303 = vsub.s32 32, %v302
        %v304 = vshll.u32 %v295, %v302
        %v305 = vshrl.u32 %v287, %v303
        %v306 = vor.u32 %v304, %v305
        %v307 = vsub.s32 4294967266, %v302
        %v308 = vadd.s32 %v307, 127
        %v309 = vshll.u32 %v308, 23
        %v310 = vor.u32 4788187, %v309
        %v311 = vand.u32 2147483647, %v310
        %v313 = vcvt.s32.f32 %v306
        %v314 = vmul.f32 %v313, %v311
        %v315 = vxor.u32 %v314, 2147483648
        %v316 = vsel %vm233, %v315, %v314
        %v317 = vsub.s32 4, %v293
        %v318 = vsel %vm233, %v317, %v293
        %v319 = vsel %vm232, %v230, %v316
        %v320 = vsel %vm232, 0, %v318
        %v321 = vcosq.f32.pop %v319
        %v322 = vsinq.f32.pop %v319
        %vm323 = vweird.f32 %v230
        %v324 = vadd.s32 %v320, 3
        %v325 = vand.u32 %v324, 3
        %vm326 = vcmp.lt.s32.totalorder %v325, 2
        %vm327 = vcmp.eq.s32.totalorder %v325, 0
        %v328 = vxor.u32 %v322, 2147483648
        %v329 = vsel %vm327, %v321, %v328
        %vm330 = vcmp.eq.s32.totalorder %v325, 2
        %v331 = vxor.u32 %v321, 2147483648
        %v332 = vsel %vm330, %v331, %v322
        %v333 = vsel %vm326, %v329, %v332
        %v334 = vsel %vm323, nan, %v333
        %v335 = vand.u32 2147483647, %v230
        %vm336 = vcmp.le.f32.partialorder %v335, 0.7853982
        %vm337 = vcmp.lt.s32.totalorder %v230, 0
        %v338 = vand.u32 %v230, 2139095040
        %v339 = vshrl.u32 %v338, 23
        %v340 = vsub.s32 %v339, 127
        %v341 = vand.u32 2147483647, %v230
        %v342 = vand.u32 %v341, 8388607
        %v343 = vor.u32 %v342, 8388608
        %v344 = vsub.s32 0, %v343
        %v345 = vadd.s32 %v340, 1
        %vm346 = vcmp.gt.s32.totalorder %v345, 0
        %v347 = vsel %vm346, %v345, 0
        %v348 = vshrl.u32 %v347, 5
        %v349 = vand.u32 %v347, 31
        %v350 = vsub.s32 32, %v349
        %v351 = vshrl.u32 683565275, %v350
        %v352 = vshll.u32 683565275, %v349
        %v353 = vshrl.u32 2475754826, %v350
        %v354 = vor.u32 %v352, %v353
        %v355 = vshll.u32 2475754826, %v349
        %v356 = vshrl.u32 2131351028, %v350
        %v357 = vor.u32 %v355, %v356
        %v358 = vshll.u32 2131351028, %v349
        %v359 = vshrl.u32 2102212464, %v350
        %v360 = vor.u32 %v358, %v359
        %v361 = vshll.u32 2102212464, %v349
        %v362 = vshrl.u32 920167782, %v350
        %v363 = vor.u32 %v361, %v362
        %v364 = vshll.u32 920167782, %v349
        %v365 = vshrl.u32 1326507024, %v350
        %v366 = vor.u32 %v364, %v365
        %vm367 = vcmp.lt.s32.totalorder %v348, 1
        %vm368 = vcmp.lt.s32.totalorder %v348, 2
        %vm369 = vcmp.lt.s32.totalorder %v348, 3
        %vm370 = vcmp.lt.s32.totalorder %v348, 4
        %v371 = vsel %vm367, %v351, %v354
        %v372 = vsel %vm370, %v360, 2102212464
        %v373 = vsel %vm369, %v357, %v372
        %v374 = vsel %vm368, %v371, %v373
        %v375 = vsel %vm367, %v354, %v357
        %v376 = vsel %vm370, %v363, 920167782
        %v377 = vsel %vm369, %v360, %v376
        %v378 = vsel %vm368, %v375, %v377
        %v379 = vsel %vm367, %v357, %v360
        %v380 = vsel %vm370, %v366, 1326507024
        %v381 = vsel %vm369, %v363, %v380
        %v382 = vsel %vm368, %v379, %v381
        %v383 = vshll.u32 %v343, 8
        %v384 = vmul.u32.u64.compose %v383, %v382
        %v385 = vextract.low.u32 %v384
        %v386 = vextract.high.u32 %v384
        %v387 = vmul.u32.u64.compose %v383, %v378
        %v388 = vextract.low.u32 %v387
        %v389 = vextract.high.u32 %v387
        %v390 = vmul.u32 %v383, %v374
        %v391 = vadd.s32 %v386, %v388
        %vm392 = vc.u32 %v386, %v388
        %v393 = vadd.s32 %v389, 1
        %v394 = vsel %vm392, %v393, %v389
        %v395 = vadd.s32 %v390, %v394
        %v396 = vadd.s32 %v395, 536870912
        %v397 = vshrl.u32 %v396, 30
        %v398 = vshll.u32 %v397, 30
        %v399 = vsub.s32 %v395, %v398
        %vm400 = vcmp.lt.s32.totalorder %v399, 0
        %v401 = vsub.s32 0, %v399
        %v402 = vsel %vm400, %v401, %v399
        %v403 = vclz %v402
        %v404 = vsub.s32 %v403, 2
        %vm405 = vcmp.gt.s32.totalorder 0, %v404
        %v406 = vsel %vm405, 0, %v404
        %v407 = vsub.s32 32, %v406
        %v408 = vshll.u32 %v399, %v406
        %v409 = vshrl.u32 %v391, %v407
        %v410 = vor.u32 %v408, %v409
        %v411 = vsub.s32 4294967266, %v406
        %v412 = vadd.s32 %v411, 127
        %v413 = vshll.u32 %v412, 23
        %v414 = vor.u32 4788187, %v413
        %v415 = vand.u32 2147483647, %v414
        %v417 = vcvt.s32.f32 %v410
        %v418 = vmul.f32 %v417, %v415
        %v419 = vxor.u32 %v418, 2147483648
        %v420 = vsel %vm337, %v419, %v418
        %v421 = vsub.s32 4, %v397
        %v422 = vsel %vm337, %v421, %v397
        %v423 = vsel %vm336, %v230, %v420
        %v424 = vsel %vm336, 0, %v422
        %v425 = vcosq.f32.pop %v423
        %v426 = vsinq.f32.pop %v423
        %vm427 = vweird.f32 %v230
        %v428 = vand.u32 %v424, 3
        %vm429 = vcmp.lt.s32.totalorder %v428, 2
        %vm430 = vcmp.eq.s32.totalorder %v428, 0
        %v431 = vxor.u32 %v426, 2147483648
        %v432 = vsel %vm430, %v425, %v431
        %vm433 = vcmp.eq.s32.totalorder %v428, 2
        %v434 = vxor.u32 %v425, 2147483648
        %v435 = vsel %vm433, %v434, %v426
        %v436 = vsel %vm429, %v432, %v435
        %v437 = vsel %vm427, nan, %v436
        %v438 = vld [vmem:[#allocation7] sm:$0xff]
        %v439 = vld [vmem:[#allocation7 + $0x8] sm:$0xff]
        %v440 = vld [vmem:[#allocation7 + $0x10] sm:$0xff]
        %v441 = vld [vmem:[#allocation7 + $0x18] sm:$0xff]
        %v443 = vlaneseq
        %v444 = vshrl.u32 %v443, 7
        %v445 = vsub.s32 0, %v444
        %v446 = vrot.slane %v334, %v445
        %v447 = vlaneseq
        %v448 = vshrl.u32 %v447, 7
        %v449 = vsub.s32 1, %v448
        %v450 = vrot.slane %v334, %v449
        %v453 = vmul.f32 %v446, %v438
        %v454 = vmul.f32 %v450, %v439
        %v455 = vmul.f32 %v446, %v440
        %v456 = vmul.f32 %v450, %v441
        %v457 = vld [vmem:[#allocation5] sm:$0xff]
        %v458 = vld [vmem:[#allocation5 + $0x8] sm:$0xff]
        %v459 = vld [vmem:[#allocation5 + $0x10] sm:$0xff]
        %v460 = vld [vmem:[#allocation5 + $0x18] sm:$0xff]
        %v462 = vlaneseq
        %v463 = vshrl.u32 %v462, 7
        %v464 = vsub.s32 0, %v463
        %v465 = vrot.slane %v437, %v464
        %v466 = vlaneseq
        %v467 = vshrl.u32 %v466, 7
        %v468 = vsub.s32 1, %v467
        %v469 = vrot.slane %v437, %v468
        %v472 = vmul.f32 %v465, %v457
        %v473 = vmul.f32 %v469, %v458
        %v474 = vmul.f32 %v465, %v459
        %v475 = vmul.f32 %v469, %v460
        %v476 = vadd.f32 %v453, %v472
        %v477 = vadd.f32 %v454, %v473
        %v478 = vadd.f32 %v455, %v474
        %v479 = vadd.f32 %v456, %v475
        %480 = vst [vmem:[%s217] sm:$0xff] %v476
        %vm481 = vcmask 523264
        %482 = vst.msk [vmem:[%s217 + $0x8] sm:$0xff] %vm481, %v477
        %483 = vst [vmem:[%s217 + $0x10] sm:$0xff] %v478
        %484 = vst.msk [vmem:[%s217 + $0x18] sm:$0xff] %vm481, %v479
        %s485 = sand.u32 %s112, 1
        %s486 = scalar_lea.sflag [#allocation4], %s485
        %s487 = sand.u32 %s112, 1
        %s488 = smul.addr %s487, 32
        %s489 = scalar_lea.vmem [#allocation8], %s488
        // Predicated region
        $region49: #{tpu_custom_call.1} parent=35 // pred_check
          %p490 = pneg %p122
        $region50: #{tpu_custom_call.1} parent=35 // pred_check_branch
          %492 = sbr.rel (%p490) target = $region52
        $region51: #{tpu_custom_call.1} parent=35 // pred_region
          %s493 = smul.u32 2, %s20
          %s494 = ssub.s32 3, %s493
          %p495 = scmp.lt.s32.totalorder %s494, 2
          %s496 = scalar_select %p495, %s494, 2
          %s497 = smul.u32 128, %s496
          %s498 = smul.u32 %s497, 2
          %s500 = ssub.s32 512, %s498
          %501 = vsyncadd %s486, %s500
          %p502 = scmp.ne.s32.totalorder 0, %s498
          %s503 = smul.addr %s493, 2
          %s504 = smul.addr %s503, 128
          %s505 = scalar_lea.hbm %s4, %s504
          %s506 = smul.u32 16, %s496
          %s507 = sshll.u32 %s489, 4
          %s508 = int_to_ptr.vmem [resolvable:$true] %s507
          %s509 = sshll.u32 %s506, 4
          %513 = dma.vmem_to_hbm [thread:$0]  (%p502), %s508, %s509, %s505, %s486, 256, 256, 16
        $region52: #{tpu_custom_call.1} parent=35 // pred_fallthru
          _
      $region36: #{tpu_custom_call.1} parent=5 // pred_fallthru
        _
      %p514 = scmp.le.s32.totalorder 2, %s15
      // Predicated region
      $region53: #{tpu_custom_call.1} parent=5 // pred_check
        %p515 = pneg %p514
      $region54: #{tpu_custom_call.1} parent=5 // pred_check_branch
        %517 = sbr.rel (%p515) target = $region56
      $region55: #{tpu_custom_call.1} parent=5 // pred_region
        %s518 = ssub.s32 %s15, 2
        // Predicated region
        $region57: #{tpu_custom_call.1} parent=55 // pred_check
          %p519 = pneg %p128
        $region58: #{tpu_custom_call.1} parent=55 // pred_check_branch
          %521 = sbr.rel (%p519) target = $region60
        $region59: #{tpu_custom_call.1} parent=55 // pred_region
          %s522 = sand.u32 %s113, 1
          %s523 = scalar_lea.sflag [#allocation4], %s522
          %s524 = sand.u32 %s113, 1
          %s525 = smul.addr %s524, 32
          %s526 = scalar_lea.vmem [#allocation8], %s525
          %527 = dma.done %s523, 512
        $region60: #{tpu_custom_call.1} parent=55 // pred_fallthru
          _
      $region56: #{tpu_custom_call.1} parent=5 // pred_fallthru
        _
    $region6: #{tpu_custom_call.1} parent=1 // loop_footer
      %s19 = sadd.s32 1, %s15
    $region7: #{tpu_custom_call.1} parent=1 // loop_footer_branch
      %14 = sbr.rel target = $region3
    $region8: #{tpu_custom_call.1} parent=1 // loop_exit
      _
    %528 = vsyncpa [#allocation3], 1
    %s529 = scalar_lea.sflag [#allocation3], 1
    %530 = vsyncpa %s529, 1
    %531 = vsyncpa [#allocation6], 1
    %532 = vsyncpa [#allocation4], 1
    %s533 = scalar_lea.sflag [#allocation4], 1
    %534 = vsyncpa %s533, 1

</llo_original>
